<compile_context>
chip_gen: v7x
topology: tpu7x:2x2x1
jax: 0.10.0
libtpu: 0.0.40
codegen_flags: <defaults>
</compile_context>

<pallas_src>
import functools

import jax
import jax.numpy as jnp
from jax.experimental import pallas as pl
from jax.experimental.pallas import tpu as pltpu


def _sqerr_sum_kernel(pred_ref, gt_ref, out_ref):
    """Sum over HW of (pred - gt)^2 for a (TB, J, HW) block.

    pred_ref / gt_ref : (TB, J, HW) blocks in their native dtype
    out_ref           : (TB, J, 1)  float32
    """
    diff = pred_ref[...].astype(jnp.float32) - gt_ref[...].astype(jnp.float32)
    out_ref[...] = jnp.sum(diff * diff, axis=-1, keepdims=True)


def _choose_batch_tile(B, J, HW, itemsize, budget_bytes=4 * 1024 * 1024):
    """Largest divisor of B whose per-input block fits the VMEM budget.

    2 inputs x 2 pipeline buffers x budget_bytes ~= 16 MiB total, safe on
    v5e/v6e/v7x (v7x has only 64 MiB VMEM/TC).  Keeps >= 2 grid steps when
    B >= 2 so the "parallel" grid axis can shard across v7x's two TCs.
    """
    per_b = J * HW * itemsize
    max_tb = max(1, budget_bytes // per_b)
    if B >= 2:
        max_tb = min(max_tb, B // 2)
    max_tb = int(max(1, min(max_tb, B)))
    for tb in range(max_tb, 0, -1):
        if B % tb == 0:
            return tb
    return 1


def joints_mse_ohkm_loss(output, target, target_weight,
                         use_target_weight=True, topk=8,
                         effective_num_joints=None):
    B, J, H, W = output.shape
    HW = H * W
    if effective_num_joints is None:
        effective_num_joints = J

    # Flatten spatial dims (contiguous reshape); keep native dtype in HBM.
    pred = output.reshape(B, J, HW)
    gt = target.reshape(B, J, HW)

    itemsize = max(pred.dtype.itemsize, gt.dtype.itemsize)
    TB = _choose_batch_tile(B, J, HW, itemsize)

    sq_sum = pl.pallas_call(
        _sqerr_sum_kernel,
        out_shape=jax.ShapeDtypeStruct((B, J, 1), jnp.float32),
        grid_spec=pltpu.PrefetchScalarGridSpec(
            num_scalar_prefetch=0,
            grid=(B // TB,),
            in_specs=[
                pl.BlockSpec((TB, J, HW), lambda b: (b, 0, 0)),
                pl.BlockSpec((TB, J, HW), lambda b: (b, 0, 0)),
            ],
            out_specs=pl.BlockSpec((TB, J, 1), lambda b: (b, 0, 0)),
        ),
        compiler_params=pltpu.CompilerParams(
            dimension_semantics=("parallel",),
            vmem_limit_bytes=48 * 1024 * 1024,  # headroom; < 64 MiB v7x physical
        ),
    )(pred, gt)

    # per_bj = mean over HW of (w*p - w*g)^2 == w^2 * mean((p-g)^2)
    per_bj = sq_sum[..., 0] * (1.0 / HW)                    # (B, J)
    if use_target_weight:
        w = target_weight.reshape(B, J).astype(jnp.float32)
        per_bj = per_bj * (w * w)

    # mse_loss = sum over joints of mean over (B, HW)  (un-normalized, as in
    # the PyTorch reference: final_loss adds this un-normalized value).
    mse_loss = jnp.sum(jnp.mean(per_bj, axis=0))

    # OHKM: per-(sample, joint) loss is 0.5 * per_bj; take top-k joints per
    # sample, average them, then average over the batch.
    half = 0.5 * per_bj
    topk_vals, _ = jax.lax.top_k(half, k=topk)              # (B, topk)
    ohkm_loss = jnp.mean(jnp.sum(topk_vals, axis=1) / topk)

    final_loss = ohkm_loss + mse_loss
    return {
        'ohkm_loss': ohkm_loss,
        'mse_loss': mse_loss / effective_num_joints,
        'final_loss': final_loss,
    }


if __name__ == "__main__":
    # Small shapes consistent with the module: B=2, J=16 joints (>= topk=8),
    # 16x16 heatmaps -> HW = 256 (lane-dense, multiple of 128).
    B, J, H, W = 2, 16, 16, 16
    key = jax.random.PRNGKey(0)
    k1, k2, k3 = jax.random.split(key, 3)
    output = jax.random.normal(k1, (B, J, H, W), dtype=jnp.float32)
    target = jax.random.normal(k2, (B, J, H, W), dtype=jnp.float32)
    target_weight = jax.random.uniform(k3, (B, J, 1), dtype=jnp.float32)

    loss_fn = jax.jit(functools.partial(joints_mse_ohkm_loss,
                                        use_target_weight=True, topk=8))
    result = loss_fn(output, target, target_weight)
    jax.block_until_ready(result['final_loss'])
    print("KERNEL_OK")
</pallas_src>

<mosaic_0001>
module attributes {stable_mosaic.version = 11 : i64} {
  func.func @_sqerr_sum_kernel(%arg0: i32, %arg1: memref<1x16x256xf32, #tpu.memory_space<vmem>>, %arg2: memref<1x16x256xf32, #tpu.memory_space<vmem>>, %arg3: memref<1x16x1xf32, #tpu.memory_space<vmem>>) attributes {dimension_semantics = [#tpu.dimension_semantics<parallel>], iteration_bounds = array<i64: 2>, scalar_prefetch = 0 : i64, scratch_operands = 0 : i64, tpu.core_type = #tpu.core_type<tc>, window_params = [{transform_indices = @transform_0, window_bounds = array<i64: 1, 16, 256>}, {transform_indices = @transform_1, window_bounds = array<i64: 1, 16, 256>}, {transform_indices = @transform_2, window_bounds = array<i64: 1, 16, 1>}]} {
    %c0 = arith.constant 0 : index
    %c0_0 = arith.constant 0 : index
    %c0_1 = arith.constant 0 : index
    %0 = vector.load %arg1[%c0, %c0_0, %c0_1] : memref<1x16x256xf32, #tpu.memory_space<vmem>>, vector<1x16x256xf32>
    %c0_2 = arith.constant 0 : index
    %c0_3 = arith.constant 0 : index
    %c0_4 = arith.constant 0 : index
    %1 = vector.load %arg2[%c0_2, %c0_3, %c0_4] : memref<1x16x256xf32, #tpu.memory_space<vmem>>, vector<1x16x256xf32>
    %2 = arith.subf %0, %1 : vector<1x16x256xf32>
    %3 = arith.mulf %2, %2 : vector<1x16x256xf32>
    %cst = arith.constant dense<0.000000e+00> : vector<1x16xf32>
    %4 = vector.multi_reduction <add>, %3, %cst [2] : vector<1x16x256xf32> to vector<1x16xf32>
    %5 = vector.shape_cast %4 : vector<1x16xf32> to vector<1x16x1xf32>
    %c0_5 = arith.constant 0 : index
    %c0_6 = arith.constant 0 : index
    %c0_7 = arith.constant 0 : index
    %6 = vector.load %arg3[%c0_5, %c0_6, %c0_7] : memref<1x16x1xf32, #tpu.memory_space<vmem>>, vector<1x16x1xf32>
    tpu.vector_store %arg3[%c0_5, %c0_6, %c0_7], %5 {strides = array<i32>} : memref<1x16x1xf32, #tpu.memory_space<vmem>>, vector<1x16x1xf32>,
    return
  }
  func.func @transform_0(%arg0: i32) -> (i32, i32, i32) {
    %c0_i32 = arith.constant 0 : i32
    %c0_i32_0 = arith.constant 0 : i32
    %c0_i32_1 = arith.constant 0 : i32
    return %arg0, %c0_i32, %c0_i32_0 : i32, i32, i32
  }
  func.func @transform_1(%arg0: i32) -> (i32, i32, i32) {
    %c0_i32 = arith.constant 0 : i32
    %c0_i32_0 = arith.constant 0 : i32
    %c0_i32_1 = arith.constant 0 : i32
    return %arg0, %c0_i32, %c0_i32_0 : i32, i32, i32
  }
  func.func @transform_2(%arg0: i32) -> (i32, i32, i32) {
    %c0_i32 = arith.constant 0 : i32
    %c0_i32_0 = arith.constant 0 : i32
    %c0_i32_1 = arith.constant 0 : i32
    return %arg0, %c0_i32, %c0_i32_0 : i32, i32, i32
  }
}

</mosaic_0001>

<llo_original>
// kernel: mul.1
$region0: #{mul.1}
  #allocation0 [shape = 's32[1]{0}', space=sflag, size = 0x4, scoped, tag = 'scoped memory for mul.1']
  %s0 = inlined_call_operand.vmem [shape: f32[2,16,1], index: 0, kind: input, shape index: {}, may-alias: {0,1}]
  %s1 = inlined_call_operand.vmem [shape: f32[2,16,1], index: 1, kind: input, shape index: {}, may-alias: {0,1}]
  %s2 = inlined_call_operand.vmem [shape: f32[2,16,1], index: 2, kind: output, shape index: {}]
  %v3 = vld [vmem:[%s0] sm:$0x1]
  %v4 = vld [vmem:[%s1] sm:$0x1]
  %5 = xla_tuple %v3, %v4
  %6 = xla_tuple %5
  %v7 = vmul.f32 %v3, %v4
  %8 = xla_tuple %v7
  %9 = vst [vmem:[%s2] sm:$0x1] %v7
  %s10 = scalar_lea.vmem %s0, 1
  %v11 = vld [vmem:[%s10] sm:$0x1]
  %s12 = scalar_lea.vmem %s1, 1
  %v13 = vld [vmem:[%s12] sm:$0x1]
  %14 = xla_tuple %v11, %v13
  %15 = xla_tuple %14
  %v16 = vmul.f32 %v11, %v13
  %17 = xla_tuple %v16
  %s18 = scalar_lea.vmem %s2, 1
  %19 = vst [vmem:[%s18] sm:$0x1] %v16

// kernel: joints_mse_ohkm_loss.1
$region0: #{joints_mse_ohkm_loss.1}
  #allocation0 [shape = 'u32[]', space=smem, size = 0x4, offset = 0x4, fixed_abs, tag = 'smem constant byte address 0x4 - core index']
  #allocation1 [shape = 'u32[144,128]{1,0:T(1,128)}', space=vmem, size = 0x12000, scoped, tag = 'internal scratch']
  %s0 = inlined_call_operand.vmem [shape: f32[2,16,256], index: 0, kind: input, shape index: {}]
  %s1 = inlined_call_operand.vmem [shape: f32[2,16,256], index: 1, kind: input, shape index: {}]
  %s2 = inlined_call_operand.vmem [shape: f32[2,16,1], index: 2, kind: output, shape index: {}]
  %s3 = sld [smem:[#allocation0]]
  $region41: #{joints_mse_ohkm_loss.1} parent=0
    _
  %s5 = ssub.s32 1, %s3
  %s6 = scalar_select 0, %s5, %s3
  loop: start=0, step=1, limit=4
  $region2: #{joints_mse_ohkm_loss.1} parent=0 // loop_pre_header
    _
  $region3: #{joints_mse_ohkm_loss.1} parent=0 // loop_header
    %s8 = sphi 0, %s12
    %p9 = scmp.ge.s32.totalorder %s8, 4
    %s18 = sphi 0, %s20
    %s21 = sphi 0, %s18
    %s22 = sphi 0, %s21
    %s38 = sphi 0, %s22
    %s44 = sphi 0, %s46
    %s47 = sphi 0, %s44
    %s48 = sphi 0, %s47
    %s64 = sphi 0, %s48
    %s70 = sphi 0, %s72
    %s73 = sphi 0, %s70
    %s74 = sphi 0, %s73
    %s90 = sphi 0, %s74
  $region4: #{joints_mse_ohkm_loss.1} parent=0 // loop_header_branch
    %11 = sbr.rel (%p9) target = $region8
  $region5: #{joints_mse_ohkm_loss.1} parent=0 // loop_body
    %s13 = ssub.s32 %s8, 1
    %s14 = ssub.s32 %s8, 2
    %s15 = sadd.s32 %s8, 1
    %s16 = ssub.s32 %s8, %s15
    %p17 = scmp.eq.s32.totalorder %s16, 0
    %s19 = sadd.s32 %s18, 1
    %s20 = scalar_select %p17, %s18, %s19
    %p23 = pneg %p17
    %p24 = scmp.eq.s32.totalorder %s8, 1
    %p25 = por %p23, %p24
    %p26 = scmp.ne.s32.totalorder %s18, %s21
    %p27 = scmp.eq.s32.totalorder %s8, 0
    %p28 = por %p26, %p27
    %p29 = scmp.ne.s32.totalorder %s18, %s21
    %p30 = scmp.eq.s32.totalorder %s13, 1
    %p31 = por %p29, %p30
    %p32 = scmp.ne.s32.totalorder %s21, %s22
    %p33 = scmp.eq.s32.totalorder %s13, 0
    %p34 = por %p32, %p33
    %p35 = scmp.ne.s32.totalorder %s21, %s22
    %p36 = scmp.eq.s32.totalorder %s14, 1
    %p37 = por %p35, %p36
    %p39 = scmp.ne.s32.totalorder %s22, %s38
    %p40 = scmp.eq.s32.totalorder %s14, 0
    %p41 = por %p39, %p40
    %s42 = ssub.s32 %s8, %s15
    %p43 = scmp.eq.s32.totalorder %s42, 0
    %s45 = sadd.s32 %s44, 1
    %s46 = scalar_select %p43, %s44, %s45
    %p49 = pneg %p43
    %p50 = scmp.eq.s32.totalorder %s8, 1
    %p51 = por %p49, %p50
    %p52 = scmp.ne.s32.totalorder %s44, %s47
    %p53 = scmp.eq.s32.totalorder %s8, 0
    %p54 = por %p52, %p53
    %p55 = scmp.ne.s32.totalorder %s44, %s47
    %p56 = scmp.eq.s32.totalorder %s13, 1
    %p57 = por %p55, %p56
    %p58 = scmp.ne.s32.totalorder %s47, %s48
    %p59 = scmp.eq.s32.totalorder %s13, 0
    %p60 = por %p58, %p59
    %p61 = scmp.ne.s32.totalorder %s47, %s48
    %p62 = scmp.eq.s32.totalorder %s14, 1
    %p63 = por %p61, %p62
    %p65 = scmp.ne.s32.totalorder %s48, %s64
    %p66 = scmp.eq.s32.totalorder %s14, 0
    %p67 = por %p65, %p66
    %s68 = ssub.s32 %s8, %s15
    %p69 = scmp.eq.s32.totalorder %s68, 0
    %s71 = sadd.s32 %s70, 1
    %s72 = scalar_select %p69, %s70, %s71
    %p75 = pneg %p69
    %p76 = scmp.eq.s32.totalorder %s8, 1
    %p77 = por %p75, %p76
    %p78 = scmp.ne.s32.totalorder %s70, %s73
    %p79 = scmp.eq.s32.totalorder %s8, 0
    %p80 = por %p78, %p79
    %p81 = scmp.ne.s32.totalorder %s70, %s73
    %p82 = scmp.eq.s32.totalorder %s13, 1
    %p83 = por %p81, %p82
    %p84 = scmp.ne.s32.totalorder %s73, %s74
    %p85 = scmp.eq.s32.totalorder %s13, 0
    %p86 = por %p84, %p85
    %p87 = scmp.ne.s32.totalorder %s73, %s74
    %p88 = scmp.eq.s32.totalorder %s14, 1
    %p89 = por %p87, %p88
    %p91 = scmp.ne.s32.totalorder %s74, %s90
    %p92 = scmp.eq.s32.totalorder %s14, 0
    %p93 = por %p91, %p92
    %p94 = scmp.le.s32.totalorder 1, %s8
    %p95 = scmp.lt.s32.totalorder %s8, 3
    %p96 = pnand %p94, %p95
    %p97 = pneg %p96
    // Predicated region
    $region9: #{joints_mse_ohkm_loss.1} parent=5 // pred_check
      _
    $region10: #{joints_mse_ohkm_loss.1} parent=5 // pred_check_branch
      %99 = sbr.rel (%p96) target = $region12
    $region11: #{joints_mse_ohkm_loss.1} parent=5 // pred_region
      %s100 = ssub.s32 %s8, 1
    $region12: #{joints_mse_ohkm_loss.1} parent=5 // pred_fallthru
      _
    %p101 = scmp.lt.s32.totalorder %s8, 2
    // Predicated region
    $region13: #{joints_mse_ohkm_loss.1} parent=5 // pred_check
      %p102 = pneg %p101
    $region14: #{joints_mse_ohkm_loss.1} parent=5 // pred_check_branch
      %104 = sbr.rel (%p102) target = $region16
    $region15: #{joints_mse_ohkm_loss.1} parent=5 // pred_region
      // Predicated region
      $region17: #{joints_mse_ohkm_loss.1} parent=15 // pred_check
        %p105 = pneg %p28
      $region18: #{joints_mse_ohkm_loss.1} parent=15 // pred_check_branch
        %107 = sbr.rel (%p105) target = $region20
      $region19: #{joints_mse_ohkm_loss.1} parent=15 // pred_region
        %p108 = scmp.lt.s32.totalorder %s8, 1
        %s109 = scalar_select %p108, %s8, 1
        %s110 = smul.addr %s109, 4
        %s111 = smul.addr %s110, 8
        %s112 = scalar_lea.vmem %s0, %s111
      $region20: #{joints_mse_ohkm_loss.1} parent=15 // pred_fallthru
        _
      // Predicated region
      $region21: #{joints_mse_ohkm_loss.1} parent=15 // pred_check
        %p113 = pneg %p54
      $region22: #{joints_mse_ohkm_loss.1} parent=15 // pred_check_branch
        %115 = sbr.rel (%p113) target = $region24
      $region23: #{joints_mse_ohkm_loss.1} parent=15 // pred_region
        %p116 = scmp.lt.s32.totalorder %s8, 1
        %s117 = scalar_select %p116, %s8, 1
        %s118 = smul.addr %s117, 4
        %s119 = smul.addr %s118, 8
        %s120 = scalar_lea.vmem %s1, %s119
      $region24: #{joints_mse_ohkm_loss.1} parent=15 // pred_fallthru
        _
    $region16: #{joints_mse_ohkm_loss.1} parent=5 // pred_fallthru
      _
    %p121 = scmp.le.s32.totalorder 1, %s8
    %p122 = scmp.lt.s32.totalorder %s8, 3
    %p123 = pnand %p121, %p122
    %p124 = pneg %p123
    // Predicated region
    $region25: #{joints_mse_ohkm_loss.1} parent=5 // pred_check
      _
    $region26: #{joints_mse_ohkm_loss.1} parent=5 // pred_check_branch
      %126 = sbr.rel (%p123) target = $region28
    $region27: #{joints_mse_ohkm_loss.1} parent=5 // pred_region
      %s127 = ssub.s32 %s8, 1
      %p128 = scmp.lt.s32.totalorder %s13, 1
      %s129 = scalar_select %p128, %s13, 1
      %s130 = smul.addr %s129, 4
      %s131 = smul.addr %s130, 8
      %s132 = scalar_lea.vmem %s0, %s131
      %p133 = pneg %p34
      %p134 = pneg %p31
      %p135 = scmp.lt.s32.totalorder %s13, 1
      %s136 = scalar_select %p135, %s13, 1
      %s137 = smul.addr %s136, 4
      %s138 = smul.addr %s137, 8
      %s139 = scalar_lea.vmem %s1, %s138
      %p140 = pneg %p60
      %p141 = pneg %p57
      %p142 = pneg %p86
      %p143 = pneg %p83
      %p144 = scmp.lt.s32.totalorder %s13, 1
      %s145 = scalar_select %p144, %s13, 1
      %s146 = smul.addr %s145, 2
      %s147 = smul.addr %s146, 8
      %s148 = scalar_lea.vmem %s2, %s147
      %p149 = scmp.lt.s32.totalorder %s13, 1
      %s150 = scalar_select %p149, %s13, 1
      %s151 = smul.addr %s150, 4
      %s152 = smul.addr %s151, 8
      %s153 = scalar_lea.vmem %s0, %s152
      %p154 = scmp.lt.s32.totalorder %s13, 1
      %s155 = scalar_select %p154, %s13, 1
      %s156 = smul.addr %s155, 4
      %s157 = smul.addr %s156, 8
      %s158 = scalar_lea.vmem %s1, %s157
      %p159 = scmp.lt.s32.totalorder %s13, 1
      %s160 = scalar_select %p159, %s13, 1
      %s161 = smul.addr %s160, 2
      %s162 = smul.addr %s161, 8
      %s163 = scalar_lea.vmem %s2, %s162
      %v164 = vld [vmem:[%s153] sm:$0xff]
      %v165 = vld [vmem:[%s153 + $0x8] sm:$0xff]
      %v166 = vld [vmem:[%s153 + $0x10] sm:$0xff]
      %v167 = vld [vmem:[%s153 + $0x18] sm:$0xff]
      %v168 = vld [vmem:[%s158] sm:$0xff]
      %v169 = vld [vmem:[%s158 + $0x8] sm:$0xff]
      %v170 = vld [vmem:[%s158 + $0x10] sm:$0xff]
      %v171 = vld [vmem:[%s158 + $0x18] sm:$0xff]
      %v172 = vsub.f32 %v164, %v168
      %v173 = vsub.f32 %v165, %v169
      %v174 = vsub.f32 %v166, %v170
      %v175 = vsub.f32 %v167, %v171
      %v176 = vmul.f32 %v172, %v172
      %v177 = vmul.f32 %v173, %v173
      %v178 = vmul.f32 %v174, %v174
      %v179 = vmul.f32 %v175, %v175
      %v180 = vadd.f32 %v176, %v177
      %181 = vadd.xlane.f32.xlu0 %v180
      %v182 = vpop.xlane.xlu0 %181
      %v183 = vadd.f32 %v178, %v179
      %184 = vadd.xlane.f32.xlu0 %v183
      %v185 = vpop.xlane.xlu0 %184
      %vm186 = vcmask 7168
      %187 = vst.msk [vmem:[%s163] sm:$0xff] %vm186, %v182
      %188 = vst.msk [vmem:[%s163 + $0x8] sm:$0xff] %vm186, %v185
      %p189 = scmp.lt.s32.totalorder %s13, 1
      %s190 = scalar_select %p189, %s13, 1
      %s191 = smul.addr %s190, 2
      %s192 = smul.addr %s191, 8
      %s193 = scalar_lea.vmem %s2, %s192
      // Predicated region
      $region29: #{joints_mse_ohkm_loss.1} parent=27 // pred_check
        %p194 = pneg %p83
      $region30: #{joints_mse_ohkm_loss.1} parent=27 // pred_check_branch
        %196 = sbr.rel (%p194) target = $region32
      $region31: #{joints_mse_ohkm_loss.1} parent=27 // pred_region
        _
      $region32: #{joints_mse_ohkm_loss.1} parent=27 // pred_fallthru
        _
    $region28: #{joints_mse_ohkm_loss.1} parent=5 // pred_fallthru
      _
    %p197 = scmp.le.s32.totalorder 2, %s8
    // Predicated region
    $region33: #{joints_mse_ohkm_loss.1} parent=5 // pred_check
      %p198 = pneg %p197
    $region34: #{joints_mse_ohkm_loss.1} parent=5 // pred_check_branch
      %200 = sbr.rel (%p198) target = $region36
    $region35: #{joints_mse_ohkm_loss.1} parent=5 // pred_region
      %s201 = ssub.s32 %s8, 2
      // Predicated region
      $region37: #{joints_mse_ohkm_loss.1} parent=35 // pred_check
        %p202 = pneg %p89
      $region38: #{joints_mse_ohkm_loss.1} parent=35 // pred_check_branch
        %204 = sbr.rel (%p202) target = $region40
      $region39: #{joints_mse_ohkm_loss.1} parent=35 // pred_region
        %p205 = scmp.lt.s32.totalorder %s14, 1
        %s206 = scalar_select %p205, %s14, 1
        %s207 = smul.addr %s206, 2
        %s208 = smul.addr %s207, 8
        %s209 = scalar_lea.vmem %s2, %s208
      $region40: #{joints_mse_ohkm_loss.1} parent=35 // pred_fallthru
        _
    $region36: #{joints_mse_ohkm_loss.1} parent=5 // pred_fallthru
      _
  $region6: #{joints_mse_ohkm_loss.1} parent=0 // loop_footer
    %s12 = sadd.s32 1, %s8
  $region7: #{joints_mse_ohkm_loss.1} parent=0 // loop_footer_branch
    %7 = sbr.rel target = $region3
  $region8: #{joints_mse_ohkm_loss.1} parent=0 // loop_exit
    _

</llo_original>
